<compile_context>
chip_gen: v7x
topology: tpu7x:2x2x1
jax: 0.10.0
libtpu: 0.0.40
codegen_flags: <defaults>
</compile_context>

<pallas_src>
import functools

import jax
import jax.numpy as jnp
from jax.experimental import pallas as pl
from jax.experimental.pallas import tpu as pltpu

BN_EPS = 1e-5


def _round_up(x, m):
    return ((x + m - 1) // m) * m


def siamese_kernel(x_ref,
                   w1_ref, b1_ref, w2_ref, b2_ref, w3_ref, b3_ref,
                   wo_ref, bo_ref, out_ref, *, compute_dtype):
    """One grid step: shared tower on a TB-row tile of both inputs + abs-diff sigmoid head."""
    tb = x_ref.shape[1]
    in_size = x_ref.shape[2]

    # (2, TB, in) -> (2*TB, in): trailing two dims keep their lane/sublane layout, the leading dim
    # just merges into sublanes -> no VMEM copy (unlike the old in-kernel concatenate). Both towers
    # run as a single matmul stream against the shared, VMEM-resident weights.
    x = x_ref[...].reshape(2 * tb, in_size)

    # Linear(input, 256) + ReLU           (BN1 is folded into w2/b2)
    h = jnp.dot(x, w1_ref[...], preferred_element_type=jnp.float32) + b1_ref[...]
    h = jnp.maximum(h, 0.0)
    # Linear(256, 128) + ReLU             (BN2 is folded into w3/b3)
    h = jnp.dot(h.astype(compute_dtype), w2_ref[...],
                preferred_element_type=jnp.float32) + b2_ref[...]
    h = jnp.maximum(h, 0.0)
    # Linear(128, 64) + ReLU
    h = jnp.dot(h.astype(compute_dtype), w3_ref[...],
                preferred_element_type=jnp.float32) + b3_ref[...]
    h = jnp.maximum(h, 0.0)
    # TODO(synk): Dropout(0.5) is identity in inference mode; train-mode stochastic dropout omitted.

    # |tower(x1) - tower(x2)|  (f32 elementwise — keeps v5e VPU on its native path)
    dist = jnp.abs(h[:tb, :] - h[tb:, :])                        # (TB, 64)

    # Head: wo (1,64) . dist^T -> logits directly as a lane-dense (1, TB) row (no width-1 output
    # column, unmasked stores). XLU transpose of dist, if any, is off the binding slot here.
    logit = jax.lax.dot_general(
        wo_ref[...], dist,
        dimension_numbers=(((1,), (1,)), ((), ())),
        preferred_element_type=jnp.float32)                      # (1, TB)
    out_ref[...] = jax.nn.sigmoid(logit + bo_ref[0, 0])


def fold_params(p, compute_dtype):
    """Fold eval-mode BatchNorm1d (running stats) into the next Linear. Exact in eval mode."""
    scale1 = p["g1"] * jax.lax.rsqrt(p["v1"] + BN_EPS)           # (1, 256)
    shift1 = p["be1"] - p["m1"] * scale1                         # (1, 256)
    scale2 = p["g2"] * jax.lax.rsqrt(p["v2"] + BN_EPS)           # (1, 128)
    shift2 = p["be2"] - p["m2"] * scale2                         # (1, 128)
    w2f = p["w2"] * scale1.T                                     # scale the input rows of w2 (f32)
    b2f = p["b2"] + shift1 @ p["w2"]
    w3f = p["w3"] * scale2.T
    b3f = p["b3"] + shift2 @ p["w3"]
    return dict(
        w1=p["w1"].astype(compute_dtype), b1=p["b1"],
        w2=w2f.astype(compute_dtype), b2=b2f,
        w3=w3f.astype(compute_dtype), b3=b3f,
        wo_row=p["wo"].T,                                        # (1, 64), kept f32 (tiny head)
        bo=p["bo"],                                              # (1, 1) -> SMEM
    )


def siamese_forward(x1, x2, params, *, tile_b=2048, compute_dtype=jnp.bfloat16):
    """Pallas forward pass. tile_b must be a multiple of 128 (keeps output tiles lane-dense)."""
    assert tile_b % 128 == 0
    B, in_size = x1.shape
    p = fold_params(params, compute_dtype)

    # Lane-aligned tile (multiple of 128) so the (1, tb) output blocks stay unmasked/lane-dense.
    tb = min(tile_b, _round_up(B, 128))
    # Ensure >= 2 grid steps when the batch is big enough so v7x's two TensorCores both get work.
    if B > 128 and _round_up(B, tb) == tb:
        tb = max(128, _round_up(tb // 2, 128))
    b_pad = _round_up(B, tb)
    num_tiles = b_pad // tb

    if b_pad != B:
        pad = ((0, b_pad - B), (0, 0))
        x1 = jnp.pad(x1, pad)
        x2 = jnp.pad(x2, pad)
    # Stack + cast in the wrapper: single (bf16) input DMA stream, no in-kernel concatenate copy.
    x = jnp.stack([x1, x2], axis=0).astype(compute_dtype)        # (2, b_pad, in)

    x_spec = pl.BlockSpec((2, tb, in_size), lambda i: (0, i, 0))

    def resident(a):  # whole array, same block every grid step -> stays in VMEM (fetched once)
        return pl.BlockSpec(a.shape, lambda i: (0, 0))

    operands = (x, p["w1"], p["b1"], p["w2"], p["b2"],
                p["w3"], p["b3"], p["wo_row"], p["bo"])
    in_specs = [
        x_spec,
        resident(p["w1"]), resident(p["b1"]),
        resident(p["w2"]), resident(p["b2"]),
        resident(p["w3"]), resident(p["b3"]),
        resident(p["wo_row"]),
        pl.BlockSpec(memory_space=pltpu.MemorySpace.SMEM),       # bo scalar lives in SMEM
    ]

    out = pl.pallas_call(
        functools.partial(siamese_kernel, compute_dtype=compute_dtype),
        out_shape=jax.ShapeDtypeStruct((1, b_pad), jnp.float32),  # batch on the lane axis
        grid=(num_tiles,),
        in_specs=in_specs,
        out_specs=pl.BlockSpec((1, tb), lambda i: (0, i)),
        compiler_params=pltpu.CompilerParams(
            dimension_semantics=("parallel",)),
    )(*operands)

    # Padded rows are sliced off here (tower(0) != 0, so never consume the raw padded output).
    return out[0, :B][:, None]               # back to (B, 1)


def make_params(key, input_size):
    """Deterministic synthetic parameters (PyTorch Linear weight (out,in) stored transposed as (in,out))."""
    ks = jax.random.split(key, 12)

    def lin(kw, kb, fan_in, fan_out):
        bound = 1.0 / jnp.sqrt(fan_in)
        w = jax.random.uniform(kw, (fan_in, fan_out), jnp.float32, -bound, bound)
        b = jax.random.uniform(kb, (1, fan_out), jnp.float32, -bound, bound)
        return w, b

    w1, b1 = lin(ks[0], ks[1], input_size, 256)
    w2, b2 = lin(ks[2], ks[3], 256, 128)
    w3, b3 = lin(ks[4], ks[5], 128, 64)
    wo, bo = lin(ks[6], ks[7], 64, 1)

    # BatchNorm1d params + running stats (nontrivial, deterministic).
    g1 = 1.0 + 0.1 * jax.random.normal(ks[8], (1, 256), jnp.float32)
    be1 = 0.1 * jax.random.normal(ks[9], (1, 256), jnp.float32)
    m1 = 0.05 * jax.random.normal(ks[10], (1, 256), jnp.float32)
    v1 = 1.0 + 0.1 * jax.random.uniform(ks[11], (1, 256), jnp.float32)

    k2 = jax.random.split(ks[11], 4)
    g2 = 1.0 + 0.1 * jax.random.normal(k2[0], (1, 128), jnp.float32)
    be2 = 0.1 * jax.random.normal(k2[1], (1, 128), jnp.float32)
    m2 = 0.05 * jax.random.normal(k2[2], (1, 128), jnp.float32)
    v2 = 1.0 + 0.1 * jax.random.uniform(k2[3], (1, 128), jnp.float32)

    return dict(
        w1=w1, b1=b1, g1=g1, be1=be1, m1=m1, v1=v1,
        w2=w2, b2=b2, g2=g2, be2=be2, m2=m2, v2=v2,
        w3=w3, b3=b3, wo=wo, bo=bo,
    )


def reference_forward(x1, x2, p):
    """Pure-JAX reference with the original (unfused) BN-eval math."""

    def tower(x):
        h = jnp.maximum(x @ p["w1"] + p["b1"], 0.0)
        h = (h - p["m1"]) / jnp.sqrt(p["v1"] + BN_EPS) * p["g1"] + p["be1"]
        h = jnp.maximum(h @ p["w2"] + p["b2"], 0.0)
        h = (h - p["m2"]) / jnp.sqrt(p["v2"] + BN_EPS) * p["g2"] + p["be2"]
        h = jnp.maximum(h @ p["w3"] + p["b3"], 0.0)
        return h

    d = jnp.abs(tower(x1) - tower(x2))
    return jax.nn.sigmoid(d @ p["wo"] + p["bo"])


if __name__ == "__main__":
    key = jax.random.PRNGKey(0)
    k_x1, k_x2, k_p = jax.random.split(key, 3)

    batch = 8
    input_size = 32  # train_left.shape[1] analogue (small synthetic feature dim)

    x1 = jax.random.normal(k_x1, (batch, input_size), jnp.float32)
    x2 = jax.random.normal(k_x2, (batch, input_size), jnp.float32)
    params = make_params(k_p, input_size)

    ref = jax.block_until_ready(reference_forward(x1, x2, params))

    # f32 matmul path: tight tolerance (only BN-folding reassociation vs. the unfused reference).
    out_f32 = jax.block_until_ready(
        siamese_forward(x1, x2, params, compute_dtype=jnp.float32))
    assert out_f32.shape == (batch, 1)
    assert jnp.allclose(out_f32, ref, atol=1e-4, rtol=1e-4), (out_f32, ref)

    # Default path (bf16 matmul operands, f32 accumulation/elementwise): precision-limited tolerance.
    out_bf16 = jax.block_until_ready(siamese_forward(x1, x2, params))
    assert out_bf16.shape == (batch, 1)
    assert jnp.allclose(out_bf16, ref, atol=3e-2, rtol=3e-2), (out_bf16, ref)

    print("KERNEL_OK")
</pallas_src>

<mosaic_0001>
module attributes {stable_mosaic.version = 11 : i64} {
  func.func @siamese_kernel(%arg0: i32, %arg1: memref<2x128x32xf32, #tpu.memory_space<vmem>>, %arg2: memref<32x256xf32, #tpu.memory_space<vmem>>, %arg3: memref<1x256xf32, #tpu.memory_space<vmem>>, %arg4: memref<256x128xf32, #tpu.memory_space<vmem>>, %arg5: memref<1x128xf32, #tpu.memory_space<vmem>>, %arg6: memref<128x64xf32, #tpu.memory_space<vmem>>, %arg7: memref<1x64xf32, #tpu.memory_space<vmem>>, %arg8: memref<1x64xf32, #tpu.memory_space<vmem>>, %arg9: memref<1x1xf32, #tpu.memory_space<smem>>, %arg10: memref<1x128xf32, #tpu.memory_space<vmem>>) attributes {dimension_semantics = [#tpu.dimension_semantics<parallel>], iteration_bounds = array<i64: 1>, scalar_prefetch = 0 : i64, scratch_operands = 0 : i64, tpu.core_type = #tpu.core_type<tc>, window_params = [{transform_indices = @transform_0, window_bounds = array<i64: 2, 128, 32>}, {pipeline_mode = #tpu.pipeline_mode<synchronous>, transform_indices = @transform_1, window_bounds = array<i64: 32, 256>}, {pipeline_mode = #tpu.pipeline_mode<synchronous>, transform_indices = @transform_2, window_bounds = array<i64: 1, 256>}, {pipeline_mode = #tpu.pipeline_mode<synchronous>, transform_indices = @transform_3, window_bounds = array<i64: 256, 128>}, {pipeline_mode = #tpu.pipeline_mode<synchronous>, transform_indices = @transform_4, window_bounds = array<i64: 1, 128>}, {pipeline_mode = #tpu.pipeline_mode<synchronous>, transform_indices = @transform_5, window_bounds = array<i64: 128, 64>}, {pipeline_mode = #tpu.pipeline_mode<synchronous>, transform_indices = @transform_6, window_bounds = array<i64: 1, 64>}, {pipeline_mode = #tpu.pipeline_mode<synchronous>, transform_indices = @transform_7, window_bounds = array<i64: 1, 64>}, {transform_indices = @transform_8, window_bounds = array<i64: 1, 1>}, {transform_indices = @transform_9, window_bounds = array<i64: 1, 128>}]} {
    %c0 = arith.constant 0 : index
    %c0_0 = arith.constant 0 : index
    %c0_1 = arith.constant 0 : index
    %0 = vector.load %arg1[%c0, %c0_0, %c0_1] : memref<2x128x32xf32, #tpu.memory_space<vmem>>, vector<2x128x32xf32>
    %1 = vector.shape_cast %0 : vector<2x128x32xf32> to vector<256x32xf32>
    %c0_2 = arith.constant 0 : index
    %c0_3 = arith.constant 0 : index
    %2 = vector.load %arg2[%c0_2, %c0_3] : memref<32x256xf32, #tpu.memory_space<vmem>>, vector<32x256xf32>
    %cst = arith.constant dense<0.000000e+00> : vector<256x256xf32>
    %3 = tpu.matmul %1, %2, %cst {dimension_numbers = #tpu.dot_dimension_numbers<[1], [0], [0], [1], [0, 0, 1, 1], [], []>} : vector<256x32xf32>, vector<32x256xf32>, vector<256x256xf32> -> vector<256x256xf32>
    %c0_4 = arith.constant 0 : index
    %c0_5 = arith.constant 0 : index
    %4 = vector.load %arg3[%c0_4, %c0_5] : memref<1x256xf32, #tpu.memory_space<vmem>>, vector<1x256xf32>
    %5 = vector.broadcast %4 : vector<1x256xf32> to vector<256x256xf32>
    %6 = arith.addf %3, %5 : vector<256x256xf32>
    %cst_6 = arith.constant 0.000000e+00 : f32
    %7 = vector.broadcast %cst_6 : f32 to vector<256x256xf32>
    %8 = arith.maximumf %6, %7 : vector<256x256xf32>
    %c0_7 = arith.constant 0 : index
    %c0_8 = arith.constant 0 : index
    %9 = vector.load %arg4[%c0_7, %c0_8] : memref<256x128xf32, #tpu.memory_space<vmem>>, vector<256x128xf32>
    %cst_9 = arith.constant dense<0.000000e+00> : vector<256x128xf32>
    %10 = tpu.matmul %8, %9, %cst_9 {dimension_numbers = #tpu.dot_dimension_numbers<[1], [0], [0], [1], [0, 0, 1, 1], [], []>} : vector<256x256xf32>, vector<256x128xf32>, vector<256x128xf32> -> vector<256x128xf32>
    %c0_10 = arith.constant 0 : index
    %c0_11 = arith.constant 0 : index
    %11 = vector.load %arg5[%c0_10, %c0_11] : memref<1x128xf32, #tpu.memory_space<vmem>>, vector<1x128xf32>
    %12 = vector.broadcast %11 : vector<1x128xf32> to vector<256x128xf32>
    %13 = arith.addf %10, %12 : vector<256x128xf32>
    %cst_12 = arith.constant 0.000000e+00 : f32
    %14 = vector.broadcast %cst_12 : f32 to vector<256x128xf32>
    %15 = arith.maximumf %13, %14 : vector<256x128xf32>
    %c0_13 = arith.constant 0 : index
    %c0_14 = arith.constant 0 : index
    %16 = vector.load %arg6[%c0_13, %c0_14] : memref<128x64xf32, #tpu.memory_space<vmem>>, vector<128x64xf32>
    %cst_15 = arith.constant dense<0.000000e+00> : vector<256x64xf32>
    %17 = tpu.matmul %15, %16, %cst_15 {dimension_numbers = #tpu.dot_dimension_numbers<[1], [0], [0], [1], [0, 0, 1, 1], [], []>} : vector<256x128xf32>, vector<128x64xf32>, vector<256x64xf32> -> vector<256x64xf32>
    %c0_16 = arith.constant 0 : index
    %c0_17 = arith.constant 0 : index
    %18 = vector.load %arg7[%c0_16, %c0_17] : memref<1x64xf32, #tpu.memory_space<vmem>>, vector<1x64xf32>
    %19 = vector.broadcast %18 : vector<1x64xf32> to vector<256x64xf32>
    %20 = arith.addf %17, %19 : vector<256x64xf32>
    %cst_18 = arith.constant 0.000000e+00 : f32
    %21 = vector.broadcast %cst_18 : f32 to vector<256x64xf32>
    %22 = arith.maximumf %20, %21 : vector<256x64xf32>
    %23 = vector.extract_strided_slice %22 {offsets = [0, 0], sizes = [128, 64], strides = [1, 1]} : vector<256x64xf32> to vector<128x64xf32>
    %24 = vector.extract_strided_slice %22 {offsets = [128, 0], sizes = [128, 64], strides = [1, 1]} : vector<256x64xf32> to vector<128x64xf32>
    %25 = arith.subf %23, %24 : vector<128x64xf32>
    %26 = math.absf %25 : vector<128x64xf32>
    %c0_19 = arith.constant 0 : index
    %c0_20 = arith.constant 0 : index
    %27 = vector.load %arg8[%c0_19, %c0_20] : memref<1x64xf32, #tpu.memory_space<vmem>>, vector<1x64xf32>
    %cst_21 = arith.constant dense<0.000000e+00> : vector<1x128xf32>
    %28 = tpu.matmul %27, %26, %cst_21 {dimension_numbers = #tpu.dot_dimension_numbers<[1], [1], [0], [0], [0, 0, 1, 0], [], []>} : vector<1x64xf32>, vector<128x64xf32>, vector<1x128xf32> -> vector<1x128xf32>
    %c0_22 = arith.constant 0 : index
    %c0_23 = arith.constant 0 : index
    %29 = memref.load %arg9[%c0_22, %c0_23] : memref<1x1xf32, #tpu.memory_space<smem>>
    %30 = vector.broadcast %29 : f32 to vector<1x128xf32>
    %31 = arith.addf %28, %30 : vector<1x128xf32>
    %32 = arith.negf %31 : vector<1x128xf32>
    %33 = math.exp %32 : vector<1x128xf32>
    %cst_24 = arith.constant 1.000000e+00 : f32
    %34 = vector.broadcast %cst_24 : f32 to vector<1x128xf32>
    %35 = arith.addf %34, %33 : vector<1x128xf32>
    %36 = arith.divf %34, %35 : vector<1x128xf32>
    %c0_25 = arith.constant 0 : index
    %c0_26 = arith.constant 0 : index
    %37 = vector.load %arg10[%c0_25, %c0_26] : memref<1x128xf32, #tpu.memory_space<vmem>>, vector<1x128xf32>
    tpu.vector_store %arg10[%c0_25, %c0_26], %36 {strides = array<i32>} : memref<1x128xf32, #tpu.memory_space<vmem>>, vector<1x128xf32>,
    return
  }
  func.func @transform_0(%arg0: i32) -> (i32, i32, i32) {
    %c0_i32 = arith.constant 0 : i32
    %c0_i32_0 = arith.constant 0 : i32
    %c0_i32_1 = arith.constant 0 : i32
    return %c0_i32, %arg0, %c0_i32_0 : i32, i32, i32
  }
  func.func @transform_1(%arg0: i32) -> (i32, i32) {
    %c0_i32 = arith.constant 0 : i32
    %c0_i32_0 = arith.constant 0 : i32
    %c0_i32_1 = arith.constant 0 : i32
    return %c0_i32, %c0_i32_0 : i32, i32
  }
  func.func @transform_2(%arg0: i32) -> (i32, i32) {
    %c0_i32 = arith.constant 0 : i32
    %c0_i32_0 = arith.constant 0 : i32
    %c0_i32_1 = arith.constant 0 : i32
    return %c0_i32, %c0_i32_0 : i32, i32
  }
  func.func @transform_3(%arg0: i32) -> (i32, i32) {
    %c0_i32 = arith.constant 0 : i32
    %c0_i32_0 = arith.constant 0 : i32
    %c0_i32_1 = arith.constant 0 : i32
    return %c0_i32, %c0_i32_0 : i32, i32
  }
  func.func @transform_4(%arg0: i32) -> (i32, i32) {
    %c0_i32 = arith.constant 0 : i32
    %c0_i32_0 = arith.constant 0 : i32
    %c0_i32_1 = arith.constant 0 : i32
    return %c0_i32, %c0_i32_0 : i32, i32
  }
  func.func @transform_5(%arg0: i32) -> (i32, i32) {
    %c0_i32 = arith.constant 0 : i32
    %c0_i32_0 = arith.constant 0 : i32
    %c0_i32_1 = arith.constant 0 : i32
    return %c0_i32, %c0_i32_0 : i32, i32
  }
  func.func @transform_6(%arg0: i32) -> (i32, i32) {
    %c0_i32 = arith.constant 0 : i32
    %c0_i32_0 = arith.constant 0 : i32
    %c0_i32_1 = arith.constant 0 : i32
    return %c0_i32, %c0_i32_0 : i32, i32
  }
  func.func @transform_7(%arg0: i32) -> (i32, i32) {
    %c0_i32 = arith.constant 0 : i32
    %c0_i32_0 = arith.constant 0 : i32
    %c0_i32_1 = arith.constant 0 : i32
    return %c0_i32, %c0_i32_0 : i32, i32
  }
  func.func @transform_8(%arg0: i32) -> (i32, i32) {
    %c0_i32 = arith.constant 0 : i32
    %c0_i32_0 = arith.constant 0 : i32
    %c0_i32_1 = arith.constant 0 : i32
    return %c0_i32, %c0_i32_0 : i32, i32
  }
  func.func @transform_9(%arg0: i32) -> (i32, i32) {
    %c0_i32 = arith.constant 0 : i32
    %c0_i32_0 = arith.constant 0 : i32
    return %c0_i32, %arg0 : i32, i32
  }
}

</mosaic_0001>

<llo_original>
// kernel: tpu_custom_call.1
$region0: #{tpu_custom_call.1}
  #allocation0 [shape = 'u32[]', space=smem, size = 0x4, offset = 0x4, fixed_abs, tag = 'smem constant byte address 0x4 - core index']
  #allocation1 [shape = 'u32[144,128]{1,0:T(1,128)}', space=vmem, size = 0x12000, scoped, tag = 'internal scratch']
  #allocation2 [shape = 'f32[1,1]{1,0:T(1,128)S(6)}', space=smem, size = 0x200, scoped, tag = 'scoped memory for tpu_custom_call.1']
  %s0 = inlined_call_operand.vmem [shape: f32[2,128,32], index: 0, kind: input, shape index: {}]
  %s1 = inlined_call_operand.vmem [shape: f32[32,256], index: 1, kind: input, shape index: {}]
  %s2 = inlined_call_operand.vmem [shape: f32[1,256], index: 2, kind: input, shape index: {}]
  %s3 = inlined_call_operand.vmem [shape: f32[256,128], index: 3, kind: input, shape index: {}]
  %s4 = inlined_call_operand.vmem [shape: f32[1,128], index: 4, kind: input, shape index: {}]
  %s5 = inlined_call_operand.vmem [shape: f32[128,64], index: 5, kind: input, shape index: {}]
  %s6 = inlined_call_operand.vmem [shape: f32[1,64], index: 6, kind: input, shape index: {}]
  %s7 = inlined_call_operand.vmem [shape: f32[1,64], index: 7, kind: input, shape index: {}]
  %s8 = inlined_call_operand.<no memory space> [shape: f32[1,1], index: 8, kind: input, shape index: {}]
  %s9 = inlined_call_operand.hbm [shape: f32[1,128], index: 9, kind: output, shape index: {}]
  %s10 = sld [smem:[#allocation0]]
  $region46: #{tpu_custom_call.1} parent=0
    _
  %s12 = ssub.s32 1, %s10
  %s13 = scalar_select 0, %s12, %s10
  %14 = sst [smem:[#allocation2]] %s8
  $region1: #{tpu_custom_call.1} parent=0
    #allocation3 [shape = 'u8[512]{0}', space=vmem, size = 0x400, scoped, tag = 'output window, operand 0, single buffered']
    #allocation4 [shape = 's32[1]{0}', space=sflag, size = 0x4, scoped, tag = 'scoped memory for tpu_custom_call.1']
    %15 = vsyncpa [#allocation4], 0
    // Predicated region
    $region2: #{tpu_custom_call.1} parent=1 // pred_check
      _
    $region3: #{tpu_custom_call.1} parent=1 // pred_check_branch
      %17 = sbr.rel (0) target = $region5
    $region4: #{tpu_custom_call.1} parent=1 // pred_region
      _
    $region5: #{tpu_custom_call.1} parent=1 // pred_fallthru
      _
    // Predicated region
    $region6: #{tpu_custom_call.1} parent=1 // pred_check
      _
    $region7: #{tpu_custom_call.1} parent=1 // pred_check_branch
      %19 = sbr.rel (0) target = $region9
    $region8: #{tpu_custom_call.1} parent=1 // pred_region
      _
    $region9: #{tpu_custom_call.1} parent=1 // pred_fallthru
      _
    // Predicated region
    $region10: #{tpu_custom_call.1} parent=1 // pred_check
      _
    $region11: #{tpu_custom_call.1} parent=1 // pred_check_branch
      %21 = sbr.rel (0) target = $region13
    $region12: #{tpu_custom_call.1} parent=1 // pred_region
      _
    $region13: #{tpu_custom_call.1} parent=1 // pred_fallthru
      _
    // Predicated region
    $region14: #{tpu_custom_call.1} parent=1 // pred_check
      _
    $region15: #{tpu_custom_call.1} parent=1 // pred_check_branch
      %23 = sbr.rel (0) target = $region17
    $region16: #{tpu_custom_call.1} parent=1 // pred_region
      _
    $region17: #{tpu_custom_call.1} parent=1 // pred_fallthru
      _
    // Predicated region
    $region18: #{tpu_custom_call.1} parent=1 // pred_check
      _
    $region19: #{tpu_custom_call.1} parent=1 // pred_check_branch
      %25 = sbr.rel (0) target = $region21
    $region20: #{tpu_custom_call.1} parent=1 // pred_region
      _
    $region21: #{tpu_custom_call.1} parent=1 // pred_fallthru
      _
    // Predicated region
    $region22: #{tpu_custom_call.1} parent=1 // pred_check
      _
    $region23: #{tpu_custom_call.1} parent=1 // pred_check_branch
      %27 = sbr.rel (0) target = $region25
    $region24: #{tpu_custom_call.1} parent=1 // pred_region
      _
    $region25: #{tpu_custom_call.1} parent=1 // pred_fallthru
      _
    // Predicated region
    $region26: #{tpu_custom_call.1} parent=1 // pred_check
      _
    $region27: #{tpu_custom_call.1} parent=1 // pred_check_branch
      %29 = sbr.rel (0) target = $region29
    $region28: #{tpu_custom_call.1} parent=1 // pred_region
      _
    $region29: #{tpu_custom_call.1} parent=1 // pred_fallthru
      _
    // Predicated region
    $region30: #{tpu_custom_call.1} parent=1 // pred_check
      _
    $region31: #{tpu_custom_call.1} parent=1 // pred_check_branch
      %31 = sbr.rel (0) target = $region33
    $region32: #{tpu_custom_call.1} parent=1 // pred_region
      _
    $region33: #{tpu_custom_call.1} parent=1 // pred_fallthru
      _
    // Predicated region
    $region34: #{tpu_custom_call.1} parent=1 // pred_check
      _
    $region35: #{tpu_custom_call.1} parent=1 // pred_check_branch
      %33 = sbr.rel (0) target = $region37
    $region36: #{tpu_custom_call.1} parent=1 // pred_region
      _
    $region37: #{tpu_custom_call.1} parent=1 // pred_fallthru
      _
    %v34 = vld [vmem:[%s0] sm:$0xff]
    %v35 = vld [vmem:[%s0 + $0x8] sm:$0xff]
    %v36 = vld [vmem:[%s0 + $0x10] sm:$0xff]
    %v37 = vld [vmem:[%s0 + $0x18] sm:$0xff]
    %v38 = vld [vmem:[%s0 + $0x20] sm:$0xff]
    %v39 = vld [vmem:[%s0 + $0x28] sm:$0xff]
    %v40 = vld [vmem:[%s0 + $0x30] sm:$0xff]
    %v41 = vld [vmem:[%s0 + $0x38] sm:$0xff]
    %v42 = vld [vmem:[%s0 + $0x40] sm:$0xff]
    %v43 = vld [vmem:[%s0 + $0x48] sm:$0xff]
    %v44 = vld [vmem:[%s0 + $0x50] sm:$0xff]
    %v45 = vld [vmem:[%s0 + $0x58] sm:$0xff]
    %v46 = vld [vmem:[%s0 + $0x60] sm:$0xff]
    %v47 = vld [vmem:[%s0 + $0x68] sm:$0xff]
    %v48 = vld [vmem:[%s0 + $0x70] sm:$0xff]
    %v49 = vld [vmem:[%s0 + $0x78] sm:$0xff]
    %v50 = vld [vmem:[%s0 + $0x80] sm:$0xff]
    %v51 = vld [vmem:[%s0 + $0x88] sm:$0xff]
    %v52 = vld [vmem:[%s0 + $0x90] sm:$0xff]
    %v53 = vld [vmem:[%s0 + $0x98] sm:$0xff]
    %v54 = vld [vmem:[%s0 + $0xa0] sm:$0xff]
    %v55 = vld [vmem:[%s0 + $0xa8] sm:$0xff]
    %v56 = vld [vmem:[%s0 + $0xb0] sm:$0xff]
    %v57 = vld [vmem:[%s0 + $0xb8] sm:$0xff]
    %v58 = vld [vmem:[%s0 + $0xc0] sm:$0xff]
    %v59 = vld [vmem:[%s0 + $0xc8] sm:$0xff]
    %v60 = vld [vmem:[%s0 + $0xd0] sm:$0xff]
    %v61 = vld [vmem:[%s0 + $0xd8] sm:$0xff]
    %v62 = vld [vmem:[%s0 + $0xe0] sm:$0xff]
    %v63 = vld [vmem:[%s0 + $0xe8] sm:$0xff]
    %v64 = vld [vmem:[%s0 + $0xf0] sm:$0xff]
    %v65 = vld [vmem:[%s0 + $0xf8] sm:$0xff]
    %v66 = vld [vmem:[%s1] sm:$0xff]
    %v67 = vld [vmem:[%s1 + $0x8] sm:$0xff]
    %v68 = vld [vmem:[%s1 + $0x10] sm:$0xff]
    %v69 = vld [vmem:[%s1 + $0x18] sm:$0xff]
    %v70 = vld [vmem:[%s1 + $0x20] sm:$0xff]
    %v71 = vld [vmem:[%s1 + $0x28] sm:$0xff]
    %v72 = vld [vmem:[%s1 + $0x30] sm:$0xff]
    %v73 = vld [vmem:[%s1 + $0x38] sm:$0xff]
    %v74 = vld [vmem:[%s2] sm:$0x3]
    %v76 = vlaneseq
    %v77 = vshrl.u32 %v76, 7
    %v78 = vsub.s32 0, %v77
    %v79 = vrot.slane %v74, %v78
    %v80 = vlaneseq
    %v81 = vshrl.u32 %v80, 7
    %v82 = vsub.s32 1, %v81
    %v83 = vrot.slane %v74, %v82
    %vm86 = vcmask 261120
    %v88 = vsel %vm86, %v34, 0
    %v91 = vsel %vm86, %v35, 0
    %v94 = vsel %vm86, %v36, 0
    %v97 = vsel %vm86, %v37, 0
    %v100 = vsel %vm86, %v38, 0
    %v103 = vsel %vm86, %v39, 0
    %v106 = vsel %vm86, %v40, 0
    %v109 = vsel %vm86, %v41, 0
    %v112 = vsel %vm86, %v42, 0
    %v115 = vsel %vm86, %v43, 0
    %v118 = vsel %vm86, %v44, 0
    %v121 = vsel %vm86, %v45, 0
    %v124 = vsel %vm86, %v46, 0
    %v127 = vsel %vm86, %v47, 0
    %v130 = vsel %vm86, %v48, 0
    %v133 = vsel %vm86, %v49, 0
    %v136 = vsel %vm86, %v50, 0
    %v139 = vsel %vm86, %v51, 0
    %v142 = vsel %vm86, %v52, 0
    %v145 = vsel %vm86, %v53, 0
    %v148 = vsel %vm86, %v54, 0
    %v151 = vsel %vm86, %v55, 0
    %v154 = vsel %vm86, %v56, 0
    %v157 = vsel %vm86, %v57, 0
    %v160 = vsel %vm86, %v58, 0
    %v163 = vsel %vm86, %v59, 0
    %v166 = vsel %vm86, %v60, 0
    %v169 = vsel %vm86, %v61, 0
    %v172 = vsel %vm86, %v62, 0
    %v175 = vsel %vm86, %v63, 0
    %v178 = vsel %vm86, %v64, 0
    %v181 = vsel %vm86, %v65, 0
    %183 = vmatprep.subr.mxu0 %v67
    %184 = vmatpush1.msra.mxu0 %v66
    %185 = vmatprep.subr.mxu0 %v69
    %186 = vmatpush1.msra.mxu0 %v68
    %187 = vmatprep.subr.mxu0 %v71
    %188 = vmatpush1.msra.mxu0 %v70
    %189 = vmatprep.subr.mxu0 %v73
    %190 = vmatpush1.msra.mxu0 %v72
    %191 = vmatprep.subr.mxu0 0.0
    %192 = vmatpush1.msra.mxu0 0.0
    %193 = vmatprep.subr.mxu0 0.0
    %194 = vmatpush1.msra.mxu0 0.0
    %195 = vmatprep.subr.mxu0 0.0
    %196 = vmatpush1.msra.mxu0 0.0
    %197 = vmatprep.subr.mxu0 0.0
    %198 = vmatpush1.msra.mxu0 0.0
    %199 = vmatprep.subr.mxu0 0.0
    %200 = vmatpush1.msra.mxu0 0.0
    %201 = vmatprep.subr.mxu0 0.0
    %202 = vmatpush1.msra.mxu0 0.0
    %203 = vmatprep.subr.mxu0 0.0
    %204 = vmatpush1.msra.mxu0 0.0
    %205 = vmatprep.subr.mxu0 0.0
    %206 = vmatpush1.msra.mxu0 0.0
    %207 = vmatprep.subr.mxu0 0.0
    %208 = vmatpush1.msra.mxu0 0.0
    %209 = vmatprep.subr.mxu0 0.0
    %210 = vmatpush1.msra.mxu0 0.0
    %211 = vmatprep.subr.mxu0 0.0
    %212 = vmatpush1.msra.mxu0 0.0
    %213 = vmatprep.subr.mxu0 0.0
    %214 = vmatpush1.msra.mxu0 0.0
    %215 = vmatprep.subr.mxu0 0.0
    %216 = vmatpush1.msra.mxu0 0.0
    %217 = vmatprep.subr.mxu0 0.0
    %218 = vmatpush1.msra.mxu0 0.0
    %219 = vmatprep.subr.mxu0 0.0
    %220 = vmatpush1.msra.mxu0 0.0
    %221 = vmatprep.subr.mxu0 0.0
    %222 = vmatpush1.msra.mxu0 0.0
    %223 = vmatprep.subr.mxu0 0.0
    %224 = vmatpush1.msra.mxu0 0.0
    %225 = vmatprep.subr.mxu0 0.0
    %226 = vmatpush1.msra.mxu0 0.0
    %227 = vmatprep.subr.mxu0 0.0
    %228 = vmatpush1.msra.mxu0 0.0
    %229 = vmatprep.subr.mxu0 0.0
    %230 = vmatpush1.msra.mxu0 0.0
    %231 = vmatprep.subr.mxu0 0.0
    %232 = vmatpush1.msra.mxu0 0.0
    %233 = vmatprep.subr.mxu0 0.0
    %234 = vmatpush1.msra.mxu0 0.0
    %235 = vmatprep.subr.mxu0 0.0
    %236 = vmatpush1.msra.mxu0 0.0
    %237 = vmatprep.subr.mxu0 0.0
    %238 = vmatpush1.msra.mxu0 0.0
    %239 = vmatprep.subr.mxu0 0.0
    %240 = vmatpush1.msra.mxu0 0.0
    %241 = vmatprep.subr.mxu0 0.0
    %242 = vmatpush1.msra.mxu0 0.0
    %243 = vmatprep.subr.mxu0 0.0
    %244 = vmatpush1.msra.mxu0 0.0
    %245 = vmatprep.subr.mxu0 0.0
    %246 = vmatpush1.msra.mxu0 0.0
    %247 = vmatprep.mubr.f32.mxu0 0.0
    %248 = vmatmul.mubr.f32.gmra.mrb[0].mxu0 %v88
    %v249 = vpop.f32.mrb[0].mxu0
    %v250 = vadd.f32 %v79, %v249
    %v251 = vpop.f32.mrb[0].mxu0
    %v252 = vadd.f32 %v83, %v251
    %253 = vmatprep.mubr.f32.mxu0 0.0
    %254 = vmatmul.mubr.f32.gmra.mrb[0].mxu0 %v91
    %v255 = vpop.f32.mrb[0].mxu0
    %v256 = vadd.f32 %v79, %v255
    %v257 = vpop.f32.mrb[0].mxu0
    %v258 = vadd.f32 %v83, %v257
    %259 = vmatprep.mubr.f32.mxu0 0.0
    %260 = vmatmul.mubr.f32.gmra.mrb[0].mxu0 %v94
    %v261 = vpop.f32.mrb[0].mxu0
    %v262 = vadd.f32 %v79, %v261
    %v263 = vpop.f32.mrb[0].mxu0
    %v264 = vadd.f32 %v83, %v263
    %265 = vmatprep.mubr.f32.mxu0 0.0
    %266 = vmatmul.mubr.f32.gmra.mrb[0].mxu0 %v97
    %v267 = vpop.f32.mrb[0].mxu0
    %v268 = vadd.f32 %v79, %v267
    %v269 = vpop.f32.mrb[0].mxu0
    %v270 = vadd.f32 %v83, %v269
    %271 = vmatprep.mubr.f32.mxu0 0.0
    %272 = vmatmul.mubr.f32.gmra.mrb[0].mxu0 %v100
    %v273 = vpop.f32.mrb[0].mxu0
    %v274 = vadd.f32 %v79, %v273
    %v275 = vpop.f32.mrb[0].mxu0
    %v276 = vadd.f32 %v83, %v275
    %277 = vmatprep.mubr.f32.mxu0 0.0
    %278 = vmatmul.mubr.f32.gmra.mrb[0].mxu0 %v103
    %v279 = vpop.f32.mrb[0].mxu0
    %v280 = vadd.f32 %v79, %v279
    %v281 = vpop.f32.mrb[0].mxu0
    %v282 = vadd.f32 %v83, %v281
    %283 = vmatprep.mubr.f32.mxu0 0.0
    %284 = vmatmul.mubr.f32.gmra.mrb[0].mxu0 %v106
    %v285 = vpop.f32.mrb[0].mxu0
    %v286 = vadd.f32 %v79, %v285
    %v287 = vpop.f32.mrb[0].mxu0
    %v288 = vadd.f32 %v83, %v287
    %289 = vmatprep.mubr.f32.mxu0 0.0
    %290 = vmatmul.mubr.f32.gmra.mrb[0].mxu0 %v109
    %v291 = vpop.f32.mrb[0].mxu0
    %v292 = vadd.f32 %v79, %v291
    %v293 = vpop.f32.mrb[0].mxu0
    %v294 = vadd.f32 %v83, %v293
    %295 = vmatprep.mubr.f32.mxu0 0.0
    %296 = vmatmul.mubr.f32.gmra.mrb[0].mxu0 %v112
    %v297 = vpop.f32.mrb[0].mxu0
    %v298 = vadd.f32 %v79, %v297
    %v299 = vpop.f32.mrb[0].mxu0
    %v300 = vadd.f32 %v83, %v299
    %301 = vmatprep.mubr.f32.mxu0 0.0
    %302 = vmatmul.mubr.f32.gmra.mrb[0].mxu0 %v115
    %v303 = vpop.f32.mrb[0].mxu0
    %v304 = vadd.f32 %v79, %v303
    %v305 = vpop.f32.mrb[0].mxu0
    %v306 = vadd.f32 %v83, %v305
    %307 = vmatprep.mubr.f32.mxu0 0.0
    %308 = vmatmul.mubr.f32.gmra.mrb[0].mxu0 %v118
    %v309 = vpop.f32.mrb[0].mxu0
    %v310 = vadd.f32 %v79, %v309
    %v311 = vpop.f32.mrb[0].mxu0
    %v312 = vadd.f32 %v83, %v311
    %313 = vmatprep.mubr.f32.mxu0 0.0
    %314 = vmatmul.mubr.f32.gmra.mrb[0].mxu0 %v121
    %v315 = vpop.f32.mrb[0].mxu0
    %v316 = vadd.f32 %v79, %v315
    %v317 = vpop.f32.mrb[0].mxu0
    %v318 = vadd.f32 %v83, %v317
    %319 = vmatprep.mubr.f32.mxu0 0.0
    %320 = vmatmul.mubr.f32.gmra.mrb[0].mxu0 %v124
    %v321 = vpop.f32.mrb[0].mxu0
    %v322 = vadd.f32 %v79, %v321
    %v323 = vpop.f32.mrb[0].mxu0
    %v324 = vadd.f32 %v83, %v323
    %325 = vmatprep.mubr.f32.mxu0 0.0
    %326 = vmatmul.mubr.f32.gmra.mrb[0].mxu0 %v127
    %v327 = vpop.f32.mrb[0].mxu0
    %v328 = vadd.f32 %v79, %v327
    %v329 = vpop.f32.mrb[0].mxu0
    %v330 = vadd.f32 %v83, %v329
    %331 = vmatprep.mubr.f32.mxu0 0.0
    %332 = vmatmul.mubr.f32.gmra.mrb[0].mxu0 %v130
    %v333 = vpop.f32.mrb[0].mxu0
    %v334 = vadd.f32 %v79, %v333
    %v335 = vpop.f32.mrb[0].mxu0
    %v336 = vadd.f32 %v83, %v335
    %337 = vmatprep.mubr.f32.mxu0 0.0
    %338 = vmatmul.mubr.f32.gmra.mrb[0].mxu0 %v133
    %v339 = vpop.f32.mrb[0].mxu0
    %v340 = vadd.f32 %v79, %v339
    %v341 = vpop.f32.mrb[0].mxu0
    %v342 = vadd.f32 %v83, %v341
    %343 = vmatprep.mubr.f32.mxu0 0.0
    %344 = vmatmul.mubr.f32.gmra.mrb[0].mxu0 %v136
    %v345 = vpop.f32.mrb[0].mxu0
    %v346 = vadd.f32 %v79, %v345
    %v347 = vpop.f32.mrb[0].mxu0
    %v348 = vadd.f32 %v83, %v347
    %349 = vmatprep.mubr.f32.mxu0 0.0
    %350 = vmatmul.mubr.f32.gmra.mrb[0].mxu0 %v139
    %v351 = vpop.f32.mrb[0].mxu0
    %v352 = vadd.f32 %v79, %v351
    %v353 = vpop.f32.mrb[0].mxu0
    %v354 = vadd.f32 %v83, %v353
    %355 = vmatprep.mubr.f32.mxu0 0.0
    %356 = vmatmul.mubr.f32.gmra.mrb[0].mxu0 %v142
    %v357 = vpop.f32.mrb[0].mxu0
    %v358 = vadd.f32 %v79, %v357
    %v359 = vpop.f32.mrb[0].mxu0
    %v360 = vadd.f32 %v83, %v359
    %361 = vmatprep.mubr.f32.mxu0 0.0
    %362 = vmatmul.mubr.f32.gmra.mrb[0].mxu0 %v145
    %v363 = vpop.f32.mrb[0].mxu0
    %v364 = vadd.f32 %v79, %v363
    %v365 = vpop.f32.mrb[0].mxu0
    %v366 = vadd.f32 %v83, %v365
    %367 = vmatprep.mubr.f32.mxu0 0.0
    %368 = vmatmul.mubr.f32.gmra.mrb[0].mxu0 %v148
    %v369 = vpop.f32.mrb[0].mxu0
    %v370 = vadd.f32 %v79, %v369
    %v371 = vpop.f32.mrb[0].mxu0
    %v372 = vadd.f32 %v83, %v371
    %373 = vmatprep.mubr.f32.mxu0 0.0
    %374 = vmatmul.mubr.f32.gmra.mrb[0].mxu0 %v151
    %v375 = vpop.f32.mrb[0].mxu0
    %v376 = vadd.f32 %v79, %v375
    %v377 = vpop.f32.mrb[0].mxu0
    %v378 = vadd.f32 %v83, %v377
    %379 = vmatprep.mubr.f32.mxu0 0.0
    %380 = vmatmul.mubr.f32.gmra.mrb[0].mxu0 %v154
    %v381 = vpop.f32.mrb[0].mxu0
    %v382 = vadd.f32 %v79, %v381
    %v383 = vpop.f32.mrb[0].mxu0
    %v384 = vadd.f32 %v83, %v383
    %385 = vmatprep.mubr.f32.mxu0 0.0
    %386 = vmatmul.mubr.f32.gmra.mrb[0].mxu0 %v157
    %v387 = vpop.f32.mrb[0].mxu0
    %v388 = vadd.f32 %v79, %v387
    %v389 = vpop.f32.mrb[0].mxu0
    %v390 = vadd.f32 %v83, %v389
    %391 = vmatprep.mubr.f32.mxu0 0.0
    %392 = vmatmul.mubr.f32.gmra.mrb[0].mxu0 %v160
    %v393 = vpop.f32.mrb[0].mxu0
    %v394 = vadd.f32 %v79, %v393
    %v395 = vpop.f32.mrb[0].mxu0
    %v396 = vadd.f32 %v83, %v395
    %397 = vmatprep.mubr.f32.mxu0 0.0
    %398 = vmatmul.mubr.f32.gmra.mrb[0].mxu0 %v163
    %v399 = vpop.f32.mrb[0].mxu0
    %v400 = vadd.f32 %v79, %v399
    %v401 = vpop.f32.mrb[0].mxu0
    %v402 = vadd.f32 %v83, %v401
    %403 = vmatprep.mubr.f32.mxu0 0.0
    %404 = vmatmul.mubr.f32.gmra.mrb[0].mxu0 %v166
    %v405 = vpop.f32.mrb[0].mxu0
    %v406 = vadd.f32 %v79, %v405
    %v407 = vpop.f32.mrb[0].mxu0
    %v408 = vadd.f32 %v83, %v407
    %409 = vmatprep.mubr.f32.mxu0 0.0
    %410 = vmatmul.mubr.f32.gmra.mrb[0].mxu0 %v169
    %v411 = vpop.f32.mrb[0].mxu0
    %v412 = vadd.f32 %v79, %v411
    %v413 = vpop.f32.mrb[0].mxu0
    %v414 = vadd.f32 %v83, %v413
    %415 = vmatprep.mubr.f32.mxu0 0.0
    %416 = vmatmul.mubr.f32.gmra.mrb[0].mxu0 %v172
    %v417 = vpop.f32.mrb[0].mxu0
    %v418 = vadd.f32 %v79, %v417
    %v419 = vpop.f32.mrb[0].mxu0
    %v420 = vadd.f32 %v83, %v419
    %421 = vmatprep.mubr.f32.mxu0 0.0
    %422 = vmatmul.mubr.f32.gmra.mrb[0].mxu0 %v175
    %v423 = vpop.f32.mrb[0].mxu0
    %v424 = vadd.f32 %v79, %v423
    %v425 = vpop.f32.mrb[0].mxu0
    %v426 = vadd.f32 %v83, %v425
    %427 = vmatprep.mubr.f32.mxu0 0.0
    %428 = vmatmul.mubr.f32.gmra.mrb[0].mxu0 %v178
    %v429 = vpop.f32.mrb[0].mxu0
    %v430 = vadd.f32 %v79, %v429
    %v431 = vpop.f32.mrb[0].mxu0
    %v432 = vadd.f32 %v83, %v431
    %433 = vmatprep.mubr.f32.mxu0 0.0
    %434 = vmatmul.mubr.f32.gmra.mrb[0].mxu0 %v181
    %v435 = vpop.f32.mrb[0].mxu0
    %v436 = vadd.f32 %v79, %v435
    %v437 = vpop.f32.mrb[0].mxu0
    %v438 = vadd.f32 %v83, %v437
    %439 = vdwg.mxu0
    %v440 = vmax.f32 %v250, 0.0
    %v441 = vmax.f32 %v252, 0.0
    %v442 = vmax.f32 %v256, 0.0
    %v443 = vmax.f32 %v258, 0.0
    %v444 = vmax.f32 %v262, 0.0
    %v445 = vmax.f32 %v264, 0.0
    %v446 = vmax.f32 %v268, 0.0
    %v447 = vmax.f32 %v270, 0.0
    %v448 = vmax.f32 %v274, 0.0
    %v449 = vmax.f32 %v276, 0.0
    %v450 = vmax.f32 %v280, 0.0
    %v451 = vmax.f32 %v282, 0.0
    %v452 = vmax.f32 %v286, 0.0
    %v453 = vmax.f32 %v288, 0.0
    %v454 = vmax.f32 %v292, 0.0
    %v455 = vmax.f32 %v294, 0.0
    %v456 = vmax.f32 %v298, 0.0
    %v457 = vmax.f32 %v300, 0.0
    %v458 = vmax.f32 %v304, 0.0
    %v459 = vmax.f32 %v306, 0.0
    %v460 = vmax.f32 %v310, 0.0
    %v461 = vmax.f32 %v312, 0.0
    %v462 = vmax.f32 %v316, 0.0
    %v463 = vmax.f32 %v318, 0.0
    %v464 = vmax.f32 %v322, 0.0
    %v465 = vmax.f32 %v324, 0.0
    %v466 = vmax.f32 %v328, 0.0
    %v467 = vmax.f32 %v330, 0.0
    %v468 = vmax.f32 %v334, 0.0
    %v469 = vmax.f32 %v336, 0.0
    %v470 = vmax.f32 %v340, 0.0
    %v471 = vmax.f32 %v342, 0.0
    %v472 = vmax.f32 %v346, 0.0
    %v473 = vmax.f32 %v348, 0.0
    %v474 = vmax.f32 %v352, 0.0
    %v475 = vmax.f32 %v354, 0.0
    %v476 = vmax.f32 %v358, 0.0
    %v477 = vmax.f32 %v360, 0.0
    %v478 = vmax.f32 %v364, 0.0
    %v479 = vmax.f32 %v366, 0.0
    %v480 = vmax.f32 %v370, 0.0
    %v481 = vmax.f32 %v372, 0.0
    %v482 = vmax.f32 %v376, 0.0
    %v483 = vmax.f32 %v378, 0.0
    %v484 = vmax.f32 %v382, 0.0
    %v485 = vmax.f32 %v384, 0.0
    %v486 = vmax.f32 %v388, 0.0
    %v487 = vmax.f32 %v390, 0.0
    %v488 = vmax.f32 %v394, 0.0
    %v489 = vmax.f32 %v396, 0.0
    %v490 = vmax.f32 %v400, 0.0
    %v491 = vmax.f32 %v402, 0.0
    %v492 = vmax.f32 %v406, 0.0
    %v493 = vmax.f32 %v408, 0.0
    %v494 = vmax.f32 %v412, 0.0
    %v495 = vmax.f32 %v414, 0.0
    %v496 = vmax.f32 %v418, 0.0
    %v497 = vmax.f32 %v420, 0.0
    %v498 = vmax.f32 %v424, 0.0
    %v499 = vmax.f32 %v426, 0.0
    %v500 = vmax.f32 %v430, 0.0
    %v501 = vmax.f32 %v432, 0.0
    %v502 = vmax.f32 %v436, 0.0
    %v503 = vmax.f32 %v438, 0.0
    %v504 = vld [vmem:[%s3] sm:$0xff]
    %v505 = vld [vmem:[%s3 + $0x8] sm:$0xff]
    %v506 = vld [vmem:[%s3 + $0x10] sm:$0xff]
    %v507 = vld [vmem:[%s3 + $0x18] sm:$0xff]
    %v508 = vld [vmem:[%s3 + $0x20] sm:$0xff]
    %v509 = vld [vmem:[%s3 + $0x28] sm:$0xff]
    %v510 = vld [vmem:[%s3 + $0x30] sm:$0xff]
    %v511 = vld [vmem:[%s3 + $0x38] sm:$0xff]
    %v512 = vld [vmem:[%s3 + $0x40] sm:$0xff]
    %v513 = vld [vmem:[%s3 + $0x48] sm:$0xff]
    %v514 = vld [vmem:[%s3 + $0x50] sm:$0xff]
    %v515 = vld [vmem:[%s3 + $0x58] sm:$0xff]
    %v516 = vld [vmem:[%s3 + $0x60] sm:$0xff]
    %v517 = vld [vmem:[%s3 + $0x68] sm:$0xff]
    %v518 = vld [vmem:[%s3 + $0x70] sm:$0xff]
    %v519 = vld [vmem:[%s3 + $0x78] sm:$0xff]
    %v520 = vld [vmem:[%s3 + $0x80] sm:$0xff]
    %v521 = vld [vmem:[%s3 + $0x88] sm:$0xff]
    %v522 = vld [vmem:[%s3 + $0x90] sm:$0xff]
    %v523 = vld [vmem:[%s3 + $0x98] sm:$0xff]
    %v524 = vld [vmem:[%s3 + $0xa0] sm:$0xff]
    %v525 = vld [vmem:[%s3 + $0xa8] sm:$0xff]
    %v526 = vld [vmem:[%s3 + $0xb0] sm:$0xff]
    %v527 = vld [vmem:[%s3 + $0xb8] sm:$0xff]
    %v528 = vld [vmem:[%s3 + $0xc0] sm:$0xff]
    %v529 = vld [vmem:[%s3 + $0xc8] sm:$0xff]
    %v530 = vld [vmem:[%s3 + $0xd0] sm:$0xff]
    %v531 = vld [vmem:[%s3 + $0xd8] sm:$0xff]
    %v532 = vld [vmem:[%s3 + $0xe0] sm:$0xff]
    %v533 = vld [vmem:[%s3 + $0xe8] sm:$0xff]
    %v534 = vld [vmem:[%s3 + $0xf0] sm:$0xff]
    %v535 = vld [vmem:[%s3 + $0xf8] sm:$0xff]
    %v536 = vld [vmem:[%s4] sm:$0x1]
    %v538 = vlaneseq
    %v539 = vshrl.u32 %v538, 7
    %v540 = vsub.s32 0, %v539
    %v541 = vrot.slane %v536, %v540
    %543 = vmatprep.subr.mxu0 0.0
    %544 = vmatpush1.msra.mxu0 %v504
    %545 = vmatprep.subr.mxu0 0.0
    %546 = vmatpush1.msra.mxu0 %v505
    %547 = vmatprep.subr.mxu0 0.0
    %548 = vmatpush1.msra.mxu0 %v506
    %549 = vmatprep.subr.mxu0 0.0
    %550 = vmatpush1.msra.mxu0 %v507
    %551 = vmatprep.subr.mxu0 0.0
    %552 = vmatpush1.msra.mxu0 %v508
    %553 = vmatprep.subr.mxu0 0.0
    %554 = vmatpush1.msra.mxu0 %v509
    %555 = vmatprep.subr.mxu0 0.0
    %556 = vmatpush1.msra.mxu0 %v510
    %557 = vmatprep.subr.mxu0 0.0
    %558 = vmatpush1.msra.mxu0 %v511
    %559 = vmatprep.subr.mxu0 0.0
    %560 = vmatpush1.msra.mxu0 %v512
    %561 = vmatprep.subr.mxu0 0.0
    %562 = vmatpush1.msra.mxu0 %v513
    %563 = vmatprep.subr.mxu0 0.0
    %564 = vmatpush1.msra.mxu0 %v514
    %565 = vmatprep.subr.mxu0 0.0
    %566 = vmatpush1.msra.mxu0 %v515
    %567 = vmatprep.subr.mxu0 0.0
    %568 = vmatpush1.msra.mxu0 %v516
    %569 = vmatprep.subr.mxu0 0.0
    %570 = vmatpush1.msra.mxu0 %v517
    %571 = vmatprep.subr.mxu0 0.0
    %572 = vmatpush1.msra.mxu0 %v518
    %573 = vmatprep.subr.mxu0 0.0
    %574 = vmatpush1.msra.mxu0 %v519
    %575 = vmatprep.subr.mxu0 0.0
    %576 = vmatpush1.msra.mxu0 %v520
    %577 = vmatprep.subr.mxu0 0.0
    %578 = vmatpush1.msra.mxu0 %v521
    %579 = vmatprep.subr.mxu0 0.0
    %580 = vmatpush1.msra.mxu0 %v522
    %581 = vmatprep.subr.mxu0 0.0
    %582 = vmatpush1.msra.mxu0 %v523
    %583 = vmatprep.subr.mxu0 0.0
    %584 = vmatpush1.msra.mxu0 %v524
    %585 = vmatprep.subr.mxu0 0.0
    %586 = vmatpush1.msra.mxu0 %v525
    %587 = vmatprep.subr.mxu0 0.0
    %588 = vmatpush1.msra.mxu0 %v526
    %589 = vmatprep.subr.mxu0 0.0
    %590 = vmatpush1.msra.mxu0 %v527
    %591 = vmatprep.subr.mxu0 0.0
    %592 = vmatpush1.msra.mxu0 %v528
    %593 = vmatprep.subr.mxu0 0.0
    %594 = vmatpush1.msra.mxu0 %v529
    %595 = vmatprep.subr.mxu0 0.0
    %596 = vmatpush1.msra.mxu0 %v530
    %597 = vmatprep.subr.mxu0 0.0
    %598 = vmatpush1.msra.mxu0 %v531
    %599 = vmatprep.subr.mxu0 0.0
    %600 = vmatpush1.msra.mxu0 %v532
    %601 = vmatprep.subr.mxu0 0.0
    %602 = vmatpush1.msra.mxu0 %v533
    %603 = vmatprep.subr.mxu0 0.0
    %604 = vmatpush1.msra.mxu0 %v534
    %605 = vmatprep.subr.mxu0 0.0
    %606 = vmatpush1.msra.mxu0 %v535
    %607 = vmatprep.mubr.f32.mxu0 %v441
    %608 = vmatmul.mubr.f32.gmra.mrb[0].mxu0 %v440
    %v609 = vpop.f32.mrb[0].mxu0
    %v610 = vadd.f32 %v541, %v609
    %v611 = vpop.f32.mrb[0].mxu0
    %612 = vmatprep.mubr.f32.mxu0 %v443
    %613 = vmatmul.mubr.f32.gmra.mrb[0].mxu0 %v442
    %v614 = vpop.f32.mrb[0].mxu0
    %v615 = vadd.f32 %v541, %v614
    %v616 = vpop.f32.mrb[0].mxu0
    %617 = vmatprep.mubr.f32.mxu0 %v445
    %618 = vmatmul.mubr.f32.gmra.mrb[0].mxu0 %v444
    %v619 = vpop.f32.mrb[0].mxu0
    %v620 = vadd.f32 %v541, %v619
    %v621 = vpop.f32.mrb[0].mxu0
    %622 = vmatprep.mubr.f32.mxu0 %v447
    %623 = vmatmul.mubr.f32.gmra.mrb[0].mxu0 %v446
    %v624 = vpop.f32.mrb[0].mxu0
    %v625 = vadd.f32 %v541, %v624
    %v626 = vpop.f32.mrb[0].mxu0
    %627 = vmatprep.mubr.f32.mxu0 %v449
    %628 = vmatmul.mubr.f32.gmra.mrb[0].mxu0 %v448
    %v629 = vpop.f32.mrb[0].mxu0
    %v630 = vadd.f32 %v541, %v629
    %v631 = vpop.f32.mrb[0].mxu0
    %632 = vmatprep.mubr.f32.mxu0 %v451
    %633 = vmatmul.mubr.f32.gmra.mrb[0].mxu0 %v450
    %v634 = vpop.f32.mrb[0].mxu0
    %v635 = vadd.f32 %v541, %v634
    %v636 = vpop.f32.mrb[0].mxu0
    %637 = vmatprep.mubr.f32.mxu0 %v453
    %638 = vmatmul.mubr.f32.gmra.mrb[0].mxu0 %v452
    %v639 = vpop.f32.mrb[0].mxu0
    %v640 = vadd.f32 %v541, %v639
    %v641 = vpop.f32.mrb[0].mxu0
    %642 = vmatprep.mubr.f32.mxu0 %v455
    %643 = vmatmul.mubr.f32.gmra.mrb[0].mxu0 %v454
    %v644 = vpop.f32.mrb[0].mxu0
    %v645 = vadd.f32 %v541, %v644
    %v646 = vpop.f32.mrb[0].mxu0
    %647 = vmatprep.mubr.f32.mxu0 %v457
    %648 = vmatmul.mubr.f32.gmra.mrb[0].mxu0 %v456
    %v649 = vpop.f32.mrb[0].mxu0
    %v650 = vadd.f32 %v541, %v649
    %v651 = vpop.f32.mrb[0].mxu0
    %652 = vmatprep.mubr.f32.mxu0 %v459
    %653 = vmatmul.mubr.f32.gmra.mrb[0].mxu0 %v458
    %v654 = vpop.f32.mrb[0].mxu0
    %v655 = vadd.f32 %v541, %v654
    %v656 = vpop.f32.mrb[0].mxu0
    %657 = vmatprep.mubr.f32.mxu0 %v461
    %658 = vmatmul.mubr.f32.gmra.mrb[0].mxu0 %v460
    %v659 = vpop.f32.mrb[0].mxu0
    %v660 = vadd.f32 %v541, %v659
    %v661 = vpop.f32.mrb[0].mxu0
    %662 = vmatprep.mubr.f32.mxu0 %v463
    %663 = vmatmul.mubr.f32.gmra.mrb[0].mxu0 %v462
    %v664 = vpop.f32.mrb[0].mxu0
    %v665 = vadd.f32 %v541, %v664
    %v666 = vpop.f32.mrb[0].mxu0
    %667 = vmatprep.mubr.f32.mxu0 %v465
    %668 = vmatmul.mubr.f32.gmra.mrb[0].mxu0 %v464
    %v669 = vpop.f32.mrb[0].mxu0
    %v670 = vadd.f32 %v541, %v669
    %v671 = vpop.f32.mrb[0].mxu0
    %672 = vmatprep.mubr.f32.mxu0 %v467
    %673 = vmatmul.mubr.f32.gmra.mrb[0].mxu0 %v466
    %v674 = vpop.f32.mrb[0].mxu0
    %v675 = vadd.f32 %v541, %v674
    %v676 = vpop.f32.mrb[0].mxu0
    %677 = vmatprep.mubr.f32.mxu0 %v469
    %678 = vmatmul.mubr.f32.gmra.mrb[0].mxu0 %v468
    %v679 = vpop.f32.mrb[0].mxu0
    %v680 = vadd.f32 %v541, %v679
    %v681 = vpop.f32.mrb[0].mxu0
    %682 = vmatprep.mubr.f32.mxu0 %v471
    %683 = vmatmul.mubr.f32.gmra.mrb[0].mxu0 %v470
    %v684 = vpop.f32.mrb[0].mxu0
    %v685 = vadd.f32 %v541, %v684
    %v686 = vpop.f32.mrb[0].mxu0
    %687 = vmatprep.mubr.f32.mxu0 %v473
    %688 = vmatmul.mubr.f32.gmra.mrb[0].mxu0 %v472
    %v689 = vpop.f32.mrb[0].mxu0
    %v690 = vadd.f32 %v541, %v689
    %v691 = vpop.f32.mrb[0].mxu0
    %692 = vmatprep.mubr.f32.mxu0 %v475
    %693 = vmatmul.mubr.f32.gmra.mrb[0].mxu0 %v474
    %v694 = vpop.f32.mrb[0].mxu0
    %v695 = vadd.f32 %v541, %v694
    %v696 = vpop.f32.mrb[0].mxu0
    %697 = vmatprep.mubr.f32.mxu0 %v477
    %698 = vmatmul.mubr.f32.gmra.mrb[0].mxu0 %v476
    %v699 = vpop.f32.mrb[0].mxu0
    %v700 = vadd.f32 %v541, %v699
    %v701 = vpop.f32.mrb[0].mxu0
    %702 = vmatprep.mubr.f32.mxu0 %v479
    %703 = vmatmul.mubr.f32.gmra.mrb[0].mxu0 %v478
    %v704 = vpop.f32.mrb[0].mxu0
    %v705 = vadd.f32 %v541, %v704
    %v706 = vpop.f32.mrb[0].mxu0
    %707 = vmatprep.mubr.f32.mxu0 %v481
    %708 = vmatmul.mubr.f32.gmra.mrb[0].mxu0 %v480
    %v709 = vpop.f32.mrb[0].mxu0
    %v710 = vadd.f32 %v541, %v709
    %v711 = vpop.f32.mrb[0].mxu0
    %712 = vmatprep.mubr.f32.mxu0 %v483
    %713 = vmatmul.mubr.f32.gmra.mrb[0].mxu0 %v482
    %v714 = vpop.f32.mrb[0].mxu0
    %v715 = vadd.f32 %v541, %v714
    %v716 = vpop.f32.mrb[0].mxu0
    %717 = vmatprep.mubr.f32.mxu0 %v485
    %718 = vmatmul.mubr.f32.gmra.mrb[0].mxu0 %v484
    %v719 = vpop.f32.mrb[0].mxu0
    %v720 = vadd.f32 %v541, %v719
    %v721 = vpop.f32.mrb[0].mxu0
    %722 = vmatprep.mubr.f32.mxu0 %v487
    %723 = vmatmul.mubr.f32.gmra.mrb[0].mxu0 %v486
    %v724 = vpop.f32.mrb[0].mxu0
    %v725 = vadd.f32 %v541, %v724
    %v726 = vpop.f32.mrb[0].mxu0
    %727 = vmatprep.mubr.f32.mxu0 %v489
    %728 = vmatmul.mubr.f32.gmra.mrb[0].mxu0 %v488
    %v729 = vpop.f32.mrb[0].mxu0
    %v730 = vadd.f32 %v541, %v729
    %v731 = vpop.f32.mrb[0].mxu0
    %732 = vmatprep.mubr.f32.mxu0 %v491
    %733 = vmatmul.mubr.f32.gmra.mrb[0].mxu0 %v490
    %v734 = vpop.f32.mrb[0].mxu0
    %v735 = vadd.f32 %v541, %v734
    %v736 = vpop.f32.mrb[0].mxu0
    %737 = vmatprep.mubr.f32.mxu0 %v493
    %738 = vmatmul.mubr.f32.gmra.mrb[0].mxu0 %v492
    %v739 = vpop.f32.mrb[0].mxu0
    %v740 = vadd.f32 %v541, %v739
    %v741 = vpop.f32.mrb[0].mxu0
    %742 = vmatprep.mubr.f32.mxu0 %v495
    %743 = vmatmul.mubr.f32.gmra.mrb[0].mxu0 %v494
    %v744 = vpop.f32.mrb[0].mxu0
    %v745 = vadd.f32 %v541, %v744
    %v746 = vpop.f32.mrb[0].mxu0
    %747 = vmatprep.mubr.f32.mxu0 %v497
    %748 = vmatmul.mubr.f32.gmra.mrb[0].mxu0 %v496
    %v749 = vpop.f32.mrb[0].mxu0
    %v750 = vadd.f32 %v541, %v749
    %v751 = vpop.f32.mrb[0].mxu0
    %752 = vmatprep.mubr.f32.mxu0 %v499
    %753 = vmatmul.mubr.f32.gmra.mrb[0].mxu0 %v498
    %v754 = vpop.f32.mrb[0].mxu0
    %v755 = vadd.f32 %v541, %v754
    %v756 = vpop.f32.mrb[0].mxu0
    %757 = vmatprep.mubr.f32.mxu0 %v501
    %758 = vmatmul.mubr.f32.gmra.mrb[0].mxu0 %v500
    %v759 = vpop.f32.mrb[0].mxu0
    %v760 = vadd.f32 %v541, %v759
    %v761 = vpop.f32.mrb[0].mxu0
    %762 = vmatprep.mubr.f32.mxu0 %v503
    %763 = vmatmul.mubr.f32.gmra.mrb[0].mxu0 %v502
    %v764 = vpop.f32.mrb[0].mxu0
    %v765 = vadd.f32 %v541, %v764
    %v766 = vpop.f32.mrb[0].mxu0
    %767 = vdwg.mxu0
    %v768 = vmax.f32 %v610, 0.0
    %v769 = vmax.f32 %v615, 0.0
    %v770 = vmax.f32 %v620, 0.0
    %v771 = vmax.f32 %v625, 0.0
    %v772 = vmax.f32 %v630, 0.0
    %v773 = vmax.f32 %v635, 0.0
    %v774 = vmax.f32 %v640, 0.0
    %v775 = vmax.f32 %v645, 0.0
    %v776 = vmax.f32 %v650, 0.0
    %v777 = vmax.f32 %v655, 0.0
    %v778 = vmax.f32 %v660, 0.0
    %v779 = vmax.f32 %v665, 0.0
    %v780 = vmax.f32 %v670, 0.0
    %v781 = vmax.f32 %v675, 0.0
    %v782 = vmax.f32 %v680, 0.0
    %v783 = vmax.f32 %v685, 0.0
    %v784 = vmax.f32 %v690, 0.0
    %v785 = vmax.f32 %v695, 0.0
    %v786 = vmax.f32 %v700, 0.0
    %v787 = vmax.f32 %v705, 0.0
    %v788 = vmax.f32 %v710, 0.0
    %v789 = vmax.f32 %v715, 0.0
    %v790 = vmax.f32 %v720, 0.0
    %v791 = vmax.f32 %v725, 0.0
    %v792 = vmax.f32 %v730, 0.0
    %v793 = vmax.f32 %v735, 0.0
    %v794 = vmax.f32 %v740, 0.0
    %v795 = vmax.f32 %v745, 0.0
    %v796 = vmax.f32 %v750, 0.0
    %v797 = vmax.f32 %v755, 0.0
    %v798 = vmax.f32 %v760, 0.0
    %v799 = vmax.f32 %v765, 0.0
    %v800 = vld [vmem:[%s5] sm:$0xff]
    %v801 = vld [vmem:[%s5 + $0x8] sm:$0xff]
    %v802 = vld [vmem:[%s5 + $0x10] sm:$0xff]
    %v803 = vld [vmem:[%s5 + $0x18] sm:$0xff]
    %v804 = vld [vmem:[%s5 + $0x20] sm:$0xff]
    %v805 = vld [vmem:[%s5 + $0x28] sm:$0xff]
    %v806 = vld [vmem:[%s5 + $0x30] sm:$0xff]
    %v807 = vld [vmem:[%s5 + $0x38] sm:$0xff]
    %v808 = vld [vmem:[%s5 + $0x40] sm:$0xff]
    %v809 = vld [vmem:[%s5 + $0x48] sm:$0xff]
    %v810 = vld [vmem:[%s5 + $0x50] sm:$0xff]
    %v811 = vld [vmem:[%s5 + $0x58] sm:$0xff]
    %v812 = vld [vmem:[%s5 + $0x60] sm:$0xff]
    %v813 = vld [vmem:[%s5 + $0x68] sm:$0xff]
    %v814 = vld [vmem:[%s5 + $0x70] sm:$0xff]
    %v815 = vld [vmem:[%s5 + $0x78] sm:$0xff]
    %v816 = vld [vmem:[%s6] sm:$0x1]
    %v818 = vlaneseq
    %v819 = vshrl.u32 %v818, 7
    %v820 = vsub.s32 0, %v819
    %v821 = vrot.slane %v816, %v820
    %823 = vmatprep.subr.mxu0 0.0
    %824 = vmatpush1.msra.mxu0 %v800
    %825 = vmatprep.subr.mxu0 0.0
    %826 = vmatpush1.msra.mxu0 %v801
    %827 = vmatprep.subr.mxu0 0.0
    %828 = vmatpush1.msra.mxu0 %v802
    %829 = vmatprep.subr.mxu0 0.0
    %830 = vmatpush1.msra.mxu0 %v803
    %831 = vmatprep.subr.mxu0 0.0
    %832 = vmatpush1.msra.mxu0 %v804
    %833 = vmatprep.subr.mxu0 0.0
    %834 = vmatpush1.msra.mxu0 %v805
    %835 = vmatprep.subr.mxu0 0.0
    %836 = vmatpush1.msra.mxu0 %v806
    %837 = vmatprep.subr.mxu0 0.0
    %838 = vmatpush1.msra.mxu0 %v807
    %839 = vmatprep.subr.mxu0 0.0
    %840 = vmatpush1.msra.mxu0 %v808
    %841 = vmatprep.subr.mxu0 0.0
    %842 = vmatpush1.msra.mxu0 %v809
    %843 = vmatprep.subr.mxu0 0.0
    %844 = vmatpush1.msra.mxu0 %v810
    %845 = vmatprep.subr.mxu0 0.0
    %846 = vmatpush1.msra.mxu0 %v811
    %847 = vmatprep.subr.mxu0 0.0
    %848 = vmatpush1.msra.mxu0 %v812
    %849 = vmatprep.subr.mxu0 0.0
    %850 = vmatpush1.msra.mxu0 %v813
    %851 = vmatprep.subr.mxu0 0.0
    %852 = vmatpush1.msra.mxu0 %v814
    %853 = vmatprep.subr.mxu0 0.0
    %854 = vmatpush1.msra.mxu0 %v815
    %855 = vmatprep.subr.mxu0 0.0
    %856 = vmatpush1.msra.mxu0 0.0
    %857 = vmatprep.subr.mxu0 0.0
    %858 = vmatpush1.msra.mxu0 0.0
    %859 = vmatprep.subr.mxu0 0.0
    %860 = vmatpush1.msra.mxu0 0.0
    %861 = vmatprep.subr.mxu0 0.0
    %862 = vmatpush1.msra.mxu0 0.0
    %863 = vmatprep.subr.mxu0 0.0
    %864 = vmatpush1.msra.mxu0 0.0
    %865 = vmatprep.subr.mxu0 0.0
    %866 = vmatpush1.msra.mxu0 0.0
    %867 = vmatprep.subr.mxu0 0.0
    %868 = vmatpush1.msra.mxu0 0.0
    %869 = vmatprep.subr.mxu0 0.0
    %870 = vmatpush1.msra.mxu0 0.0
    %871 = vmatprep.subr.mxu0 0.0
    %872 = vmatpush1.msra.mxu0 0.0
    %873 = vmatprep.subr.mxu0 0.0
    %874 = vmatpush1.msra.mxu0 0.0
    %875 = vmatprep.subr.mxu0 0.0
    %876 = vmatpush1.msra.mxu0 0.0
    %877 = vmatprep.subr.mxu0 0.0
    %878 = vmatpush1.msra.mxu0 0.0
    %879 = vmatprep.subr.mxu0 0.0
    %880 = vmatpush1.msra.mxu0 0.0
    %881 = vmatprep.subr.mxu0 0.0
    %882 = vmatpush1.msra.mxu0 0.0
    %883 = vmatprep.subr.mxu0 0.0
    %884 = vmatpush1.msra.mxu0 0.0
    %885 = vmatprep.subr.mxu0 0.0
    %886 = vmatpush1.msra.mxu0 0.0
    %887 = vmatprep.mubr.f32.mxu0 0.0
    %888 = vmatmul.mubr.f32.gmra.mrb[0].mxu0 %v768
    %v889 = vpop.f32.mrb[0].mxu0
    %v890 = vadd.f32 %v821, %v889
    %v891 = vpop.f32.mrb[0].mxu0
    %892 = vmatprep.mubr.f32.mxu0 0.0
    %893 = vmatmul.mubr.f32.gmra.mrb[0].mxu0 %v769
    %v894 = vpop.f32.mrb[0].mxu0
    %v895 = vadd.f32 %v821, %v894
    %v896 = vpop.f32.mrb[0].mxu0
    %897 = vmatprep.mubr.f32.mxu0 0.0
    %898 = vmatmul.mubr.f32.gmra.mrb[0].mxu0 %v770
    %v899 = vpop.f32.mrb[0].mxu0
    %v900 = vadd.f32 %v821, %v899
    %v901 = vpop.f32.mrb[0].mxu0
    %902 = vmatprep.mubr.f32.mxu0 0.0
    %903 = vmatmul.mubr.f32.gmra.mrb[0].mxu0 %v771
    %v904 = vpop.f32.mrb[0].mxu0
    %v905 = vadd.f32 %v821, %v904
    %v906 = vpop.f32.mrb[0].mxu0
    %907 = vmatprep.mubr.f32.mxu0 0.0
    %908 = vmatmul.mubr.f32.gmra.mrb[0].mxu0 %v772
    %v909 = vpop.f32.mrb[0].mxu0
    %v910 = vadd.f32 %v821, %v909
    %v911 = vpop.f32.mrb[0].mxu0
    %912 = vmatprep.mubr.f32.mxu0 0.0
    %913 = vmatmul.mubr.f32.gmra.mrb[0].mxu0 %v773
    %v914 = vpop.f32.mrb[0].mxu0
    %v915 = vadd.f32 %v821, %v914
    %v916 = vpop.f32.mrb[0].mxu0
    %917 = vmatprep.mubr.f32.mxu0 0.0
    %918 = vmatmul.mubr.f32.gmra.mrb[0].mxu0 %v774
    %v919 = vpop.f32.mrb[0].mxu0
    %v920 = vadd.f32 %v821, %v919
    %v921 = vpop.f32.mrb[0].mxu0
    %922 = vmatprep.mubr.f32.mxu0 0.0
    %923 = vmatmul.mubr.f32.gmra.mrb[0].mxu0 %v775
    %v924 = vpop.f32.mrb[0].mxu0
    %v925 = vadd.f32 %v821, %v924
    %v926 = vpop.f32.mrb[0].mxu0
    %927 = vmatprep.mubr.f32.mxu0 0.0
    %928 = vmatmul.mubr.f32.gmra.mrb[0].mxu0 %v776
    %v929 = vpop.f32.mrb[0].mxu0
    %v930 = vadd.f32 %v821, %v929
    %v931 = vpop.f32.mrb[0].mxu0
    %932 = vmatprep.mubr.f32.mxu0 0.0
    %933 = vmatmul.mubr.f32.gmra.mrb[0].mxu0 %v777
    %v934 = vpop.f32.mrb[0].mxu0
    %v935 = vadd.f32 %v821, %v934
    %v936 = vpop.f32.mrb[0].mxu0
    %937 = vmatprep.mubr.f32.mxu0 0.0
    %938 = vmatmul.mubr.f32.gmra.mrb[0].mxu0 %v778
    %v939 = vpop.f32.mrb[0].mxu0
    %v940 = vadd.f32 %v821, %v939
    %v941 = vpop.f32.mrb[0].mxu0
    %942 = vmatprep.mubr.f32.mxu0 0.0
    %943 = vmatmul.mubr.f32.gmra.mrb[0].mxu0 %v779
    %v944 = vpop.f32.mrb[0].mxu0
    %v945 = vadd.f32 %v821, %v944
    %v946 = vpop.f32.mrb[0].mxu0
    %947 = vmatprep.mubr.f32.mxu0 0.0
    %948 = vmatmul.mubr.f32.gmra.mrb[0].mxu0 %v780
    %v949 = vpop.f32.mrb[0].mxu0
    %v950 = vadd.f32 %v821, %v949
    %v951 = vpop.f32.mrb[0].mxu0
    %952 = vmatprep.mubr.f32.mxu0 0.0
    %953 = vmatmul.mubr.f32.gmra.mrb[0].mxu0 %v781
    %v954 = vpop.f32.mrb[0].mxu0
    %v955 = vadd.f32 %v821, %v954
    %v956 = vpop.f32.mrb[0].mxu0
    %957 = vmatprep.mubr.f32.mxu0 0.0
    %958 = vmatmul.mubr.f32.gmra.mrb[0].mxu0 %v782
    %v959 = vpop.f32.mrb[0].mxu0
    %v960 = vadd.f32 %v821, %v959
    %v961 = vpop.f32.mrb[0].mxu0
    %962 = vmatprep.mubr.f32.mxu0 0.0
    %963 = vmatmul.mubr.f32.gmra.mrb[0].mxu0 %v783
    %v964 = vpop.f32.mrb[0].mxu0
    %v965 = vadd.f32 %v821, %v964
    %v966 = vpop.f32.mrb[0].mxu0
    %967 = vmatprep.mubr.f32.mxu0 0.0
    %968 = vmatmul.mubr.f32.gmra.mrb[0].mxu0 %v784
    %v969 = vpop.f32.mrb[0].mxu0
    %v970 = vadd.f32 %v821, %v969
    %v971 = vpop.f32.mrb[0].mxu0
    %972 = vmatprep.mubr.f32.mxu0 0.0
    %973 = vmatmul.mubr.f32.gmra.mrb[0].mxu0 %v785
    %v974 = vpop.f32.mrb[0].mxu0
    %v975 = vadd.f32 %v821, %v974
    %v976 = vpop.f32.mrb[0].mxu0
    %977 = vmatprep.mubr.f32.mxu0 0.0
    %978 = vmatmul.mubr.f32.gmra.mrb[0].mxu0 %v786
    %v979 = vpop.f32.mrb[0].mxu0
    %v980 = vadd.f32 %v821, %v979
    %v981 = vpop.f32.mrb[0].mxu0
    %982 = vmatprep.mubr.f32.mxu0 0.0
    %983 = vmatmul.mubr.f32.gmra.mrb[0].mxu0 %v787
    %v984 = vpop.f32.mrb[0].mxu0
    %v985 = vadd.f32 %v821, %v984
    %v986 = vpop.f32.mrb[0].mxu0
    %987 = vmatprep.mubr.f32.mxu0 0.0
    %988 = vmatmul.mubr.f32.gmra.mrb[0].mxu0 %v788
    %v989 = vpop.f32.mrb[0].mxu0
    %v990 = vadd.f32 %v821, %v989
    %v991 = vpop.f32.mrb[0].mxu0
    %992 = vmatprep.mubr.f32.mxu0 0.0
    %993 = vmatmul.mubr.f32.gmra.mrb[0].mxu0 %v789
    %v994 = vpop.f32.mrb[0].mxu0
    %v995 = vadd.f32 %v821, %v994
    %v996 = vpop.f32.mrb[0].mxu0
    %997 = vmatprep.mubr.f32.mxu0 0.0
    %998 = vmatmul.mubr.f32.gmra.mrb[0].mxu0 %v790
    %v999 = vpop.f32.mrb[0].mxu0
    %v1000 = vadd.f32 %v821, %v999
    %v1001 = vpop.f32.mrb[0].mxu0
    %1002 = vmatprep.mubr.f32.mxu0 0.0
    %1003 = vmatmul.mubr.f32.gmra.mrb[0].mxu0 %v791
    %v1004 = vpop.f32.mrb[0].mxu0
    %v1005 = vadd.f32 %v821, %v1004
    %v1006 = vpop.f32.mrb[0].mxu0
    %1007 = vmatprep.mubr.f32.mxu0 0.0
    %1008 = vmatmul.mubr.f32.gmra.mrb[0].mxu0 %v792
    %v1009 = vpop.f32.mrb[0].mxu0
    %v1010 = vadd.f32 %v821, %v1009
    %v1011 = vpop.f32.mrb[0].mxu0
    %1012 = vmatprep.mubr.f32.mxu0 0.0
    %1013 = vmatmul.mubr.f32.gmra.mrb[0].mxu0 %v793
    %v1014 = vpop.f32.mrb[0].mxu0
    %v1015 = vadd.f32 %v821, %v1014
    %v1016 = vpop.f32.mrb[0].mxu0
    %1017 = vmatprep.mubr.f32.mxu0 0.0
    %1018 = vmatmul.mubr.f32.gmra.mrb[0].mxu0 %v794
    %v1019 = vpop.f32.mrb[0].mxu0
    %v1020 = vadd.f32 %v821, %v1019
    %v1021 = vpop.f32.mrb[0].mxu0
    %1022 = vmatprep.mubr.f32.mxu0 0.0
    %1023 = vmatmul.mubr.f32.gmra.mrb[0].mxu0 %v795
    %v1024 = vpop.f32.mrb[0].mxu0
    %v1025 = vadd.f32 %v821, %v1024
    %v1026 = vpop.f32.mrb[0].mxu0
    %1027 = vmatprep.mubr.f32.mxu0 0.0
    %1028 = vmatmul.mubr.f32.gmra.mrb[0].mxu0 %v796
    %v1029 = vpop.f32.mrb[0].mxu0
    %v1030 = vadd.f32 %v821, %v1029
    %v1031 = vpop.f32.mrb[0].mxu0
    %1032 = vmatprep.mubr.f32.mxu0 0.0
    %1033 = vmatmul.mubr.f32.gmra.mrb[0].mxu0 %v797
    %v1034 = vpop.f32.mrb[0].mxu0
    %v1035 = vadd.f32 %v821, %v1034
    %v1036 = vpop.f32.mrb[0].mxu0
    %1037 = vmatprep.mubr.f32.mxu0 0.0
    %1038 = vmatmul.mubr.f32.gmra.mrb[0].mxu0 %v798
    %v1039 = vpop.f32.mrb[0].mxu0
    %v1040 = vadd.f32 %v821, %v1039
    %v1041 = vpop.f32.mrb[0].mxu0
    %1042 = vmatprep.mubr.f32.mxu0 0.0
    %1043 = vmatmul.mubr.f32.gmra.mrb[0].mxu0 %v799
    %v1044 = vpop.f32.mrb[0].mxu0
    %v1045 = vadd.f32 %v821, %v1044
    %v1046 = vpop.f32.mrb[0].mxu0
    %1047 = vdwg.mxu0
    %v1048 = vmax.f32 %v890, 0.0
    %v1049 = vmax.f32 %v895, 0.0
    %v1050 = vmax.f32 %v900, 0.0
    %v1051 = vmax.f32 %v905, 0.0
    %v1052 = vmax.f32 %v910, 0.0
    %v1053 = vmax.f32 %v915, 0.0
    %v1054 = vmax.f32 %v920, 0.0
    %v1055 = vmax.f32 %v925, 0.0
    %v1056 = vmax.f32 %v930, 0.0
    %v1057 = vmax.f32 %v935, 0.0
    %v1058 = vmax.f32 %v940, 0.0
    %v1059 = vmax.f32 %v945, 0.0
    %v1060 = vmax.f32 %v950, 0.0
    %v1061 = vmax.f32 %v955, 0.0
    %v1062 = vmax.f32 %v960, 0.0
    %v1063 = vmax.f32 %v965, 0.0
    %v1064 = vmax.f32 %v970, 0.0
    %v1065 = vmax.f32 %v975, 0.0
    %v1066 = vmax.f32 %v980, 0.0
    %v1067 = vmax.f32 %v985, 0.0
    %v1068 = vmax.f32 %v990, 0.0
    %v1069 = vmax.f32 %v995, 0.0
    %v1070 = vmax.f32 %v1000, 0.0
    %v1071 = vmax.f32 %v1005, 0.0
    %v1072 = vmax.f32 %v1010, 0.0
    %v1073 = vmax.f32 %v1015, 0.0
    %v1074 = vmax.f32 %v1020, 0.0
    %v1075 = vmax.f32 %v1025, 0.0
    %v1076 = vmax.f32 %v1030, 0.0
    %v1077 = vmax.f32 %v1035, 0.0
    %v1078 = vmax.f32 %v1040, 0.0
    %v1079 = vmax.f32 %v1045, 0.0
    %v1080 = vsub.f32 %v1048, %v1064
    %v1081 = vsub.f32 %v1049, %v1065
    %v1082 = vsub.f32 %v1050, %v1066
    %v1083 = vsub.f32 %v1051, %v1067
    %v1084 = vsub.f32 %v1052, %v1068
    %v1085 = vsub.f32 %v1053, %v1069
    %v1086 = vsub.f32 %v1054, %v1070
    %v1087 = vsub.f32 %v1055, %v1071
    %v1088 = vsub.f32 %v1056, %v1072
    %v1089 = vsub.f32 %v1057, %v1073
    %v1090 = vsub.f32 %v1058, %v1074
    %v1091 = vsub.f32 %v1059, %v1075
    %v1092 = vsub.f32 %v1060, %v1076
    %v1093 = vsub.f32 %v1061, %v1077
    %v1094 = vsub.f32 %v1062, %v1078
    %v1095 = vsub.f32 %v1063, %v1079
    %v1096 = vand.u32 2147483647, %v1080
    %v1097 = vand.u32 2147483647, %v1081
    %v1098 = vand.u32 2147483647, %v1082
    %v1099 = vand.u32 2147483647, %v1083
    %v1100 = vand.u32 2147483647, %v1084
    %v1101 = vand.u32 2147483647, %v1085
    %v1102 = vand.u32 2147483647, %v1086
    %v1103 = vand.u32 2147483647, %v1087
    %v1104 = vand.u32 2147483647, %v1088
    %v1105 = vand.u32 2147483647, %v1089
    %v1106 = vand.u32 2147483647, %v1090
    %v1107 = vand.u32 2147483647, %v1091
    %v1108 = vand.u32 2147483647, %v1092
    %v1109 = vand.u32 2147483647, %v1093
    %v1110 = vand.u32 2147483647, %v1094
    %v1111 = vand.u32 2147483647, %v1095
    %v1112 = vld [vmem:[%s7] sm:$0x1]
    %s1113 = sld [smem:[#allocation2]]
    %v1114 = vstv %s1113
    %vm1115 = vcmask 523264
    %v1117 = vsel %vm1115, %v1112, 0
    %v1120 = vsel %vm1115, %v1096, 0
    %v1123 = vsel %vm1115, %v1097, 0
    %v1126 = vsel %vm1115, %v1098, 0
    %v1129 = vsel %vm1115, %v1099, 0
    %v1132 = vsel %vm1115, %v1100, 0
    %v1135 = vsel %vm1115, %v1101, 0
    %v1138 = vsel %vm1115, %v1102, 0
    %v1141 = vsel %vm1115, %v1103, 0
    %v1144 = vsel %vm1115, %v1104, 0
    %v1147 = vsel %vm1115, %v1105, 0
    %v1150 = vsel %vm1115, %v1106, 0
    %v1153 = vsel %vm1115, %v1107, 0
    %v1156 = vsel %vm1115, %v1108, 0
    %v1159 = vsel %vm1115, %v1109, 0
    %v1162 = vsel %vm1115, %v1110, 0
    %v1165 = vsel %vm1115, %v1111, 0
    %1167 = vmatprep.subr.mxu0 0.0
    %1168 = vmatpush1.xpose.msra.mxu0 %v1120
    %1169 = vmatprep.subr.mxu0 0.0
    %1170 = vmatpush1.xpose.msra.mxu0 %v1123
    %1171 = vmatprep.subr.mxu0 0.0
    %1172 = vmatpush1.xpose.msra.mxu0 %v1126
    %1173 = vmatprep.subr.mxu0 0.0
    %1174 = vmatpush1.xpose.msra.mxu0 %v1129
    %1175 = vmatprep.subr.mxu0 0.0
    %1176 = vmatpush1.xpose.msra.mxu0 %v1132
    %1177 = vmatprep.subr.mxu0 0.0
    %1178 = vmatpush1.xpose.msra.mxu0 %v1135
    %1179 = vmatprep.subr.mxu0 0.0
    %1180 = vmatpush1.xpose.msra.mxu0 %v1138
    %1181 = vmatprep.subr.mxu0 0.0
    %1182 = vmatpush1.xpose.msra.mxu0 %v1141
    %1183 = vmatprep.subr.mxu0 0.0
    %1184 = vmatpush1.xpose.msra.mxu0 %v1144
    %1185 = vmatprep.subr.mxu0 0.0
    %1186 = vmatpush1.xpose.msra.mxu0 %v1147
    %1187 = vmatprep.subr.mxu0 0.0
    %1188 = vmatpush1.xpose.msra.mxu0 %v1150
    %1189 = vmatprep.subr.mxu0 0.0
    %1190 = vmatpush1.xpose.msra.mxu0 %v1153
    %1191 = vmatprep.subr.mxu0 0.0
    %1192 = vmatpush1.xpose.msra.mxu0 %v1156
    %1193 = vmatprep.subr.mxu0 0.0
    %1194 = vmatpush1.xpose.msra.mxu0 %v1159
    %1195 = vmatprep.subr.mxu0 0.0
    %1196 = vmatpush1.xpose.msra.mxu0 %v1162
    %1197 = vmatprep.subr.mxu0 0.0
    %1198 = vmatpush1.xpose.msra.mxu0 %v1165
    %1199 = vmatprep.subr.mxu0 0.0
    %1200 = vmatpush1.xpose.msra.mxu0 0.0
    %1201 = vmatprep.subr.mxu0 0.0
    %1202 = vmatpush1.xpose.msra.mxu0 0.0
    %1203 = vmatprep.subr.mxu0 0.0
    %1204 = vmatpush1.xpose.msra.mxu0 0.0
    %1205 = vmatprep.subr.mxu0 0.0
    %1206 = vmatpush1.xpose.msra.mxu0 0.0
    %1207 = vmatprep.subr.mxu0 0.0
    %1208 = vmatpush1.xpose.msra.mxu0 0.0
    %1209 = vmatprep.subr.mxu0 0.0
    %1210 = vmatpush1.xpose.msra.mxu0 0.0
    %1211 = vmatprep.subr.mxu0 0.0
    %1212 = vmatpush1.xpose.msra.mxu0 0.0
    %1213 = vmatprep.subr.mxu0 0.0
    %1214 = vmatpush1.xpose.msra.mxu0 0.0
    %1215 = vmatprep.subr.mxu0 0.0
    %1216 = vmatpush1.xpose.msra.mxu0 0.0
    %1217 = vmatprep.subr.mxu0 0.0
    %1218 = vmatpush1.xpose.msra.mxu0 0.0
    %1219 = vmatprep.subr.mxu0 0.0
    %1220 = vmatpush1.xpose.msra.mxu0 0.0
    %1221 = vmatprep.subr.mxu0 0.0
    %1222 = vmatpush1.xpose.msra.mxu0 0.0
    %1223 = vmatprep.subr.mxu0 0.0
    %1224 = vmatpush1.xpose.msra.mxu0 0.0
    %1225 = vmatprep.subr.mxu0 0.0
    %1226 = vmatpush1.xpose.msra.mxu0 0.0
    %1227 = vmatprep.subr.mxu0 0.0
    %1228 = vmatpush1.xpose.msra.mxu0 0.0
    %1229 = vmatprep.subr.mxu0 0.0
    %1230 = vmatpush1.xpose.msra.mxu0 0.0
    %1231 = vmatprep.mubr.f32.mxu0 0.0
    %1232 = vmatmul.mubr.f32.gmra.mrb[0].mxu0 %v1117
    %v1233 = vpop.f32.mrb[0].mxu0
    %v1234 = vadd.f32 %v1114, %v1233
    %v1235 = vpop.f32.mrb[0].mxu0
    %1236 = vdwg.mxu0
    %v1237 = vxor.u32 %v1234, 2147483648
    %v1238 = vmul.f32 %v1237, 1.442695
    %v1239 = vpow.pop %v1238
    %v1240 = vadd.f32 %v1239, 1.0
    %v1241 = vrcp.pop %v1240
    %v1242 = vmul.f32 1.0, %v1241
    %1243 = vst [vmem:[#allocation3] sm:$0x1] %v1242
    // Predicated region
    $region38: #{tpu_custom_call.1} parent=1 // pred_check
      _
    $region39: #{tpu_custom_call.1} parent=1 // pred_check_branch
      %1245 = sbr.rel (0) target = $region41
    $region40: #{tpu_custom_call.1} parent=1 // pred_region
      %s1247 = ssub.s32 16, 16
      %1248 = vsyncadd [#allocation4], %s1247
      %s1250 = sshll.u32 [#allocation3], 4
      %s1251 = int_to_ptr.vmem [resolvable:$true] %s1250
      %1253 = dma.vmem_to_hbm [thread:$0]  %s1251, 16, %s9, [#allocation4]
    $region41: #{tpu_custom_call.1} parent=1 // pred_fallthru
      _
    // Predicated region
    $region42: #{tpu_custom_call.1} parent=1 // pred_check
      _
    $region43: #{tpu_custom_call.1} parent=1 // pred_check_branch
      %1255 = sbr.rel (0) target = $region45
    $region44: #{tpu_custom_call.1} parent=1 // pred_region
      %1256 = dma.done [#allocation4], 16
    $region45: #{tpu_custom_call.1} parent=1 // pred_fallthru
      _
    %1257 = vsyncpa [#allocation4], 1

</llo_original>
